<compile_context>
chip_gen: v6e
topology: v6e:2x2x1
jax: 0.10.0
libtpu: 0.0.40
codegen_flags: <defaults>
</compile_context>

<pallas_src>
import functools

import jax
import jax.numpy as jnp
from jax import lax
from jax.experimental import pallas as pl
from jax.experimental.pallas import tpu as pltpu


_LANE = 128
_SUBLANE = 8


def _round_up(x, m):
    return ((x + m - 1) // m) * m


def _vmem_budget_bytes():
    """0.75 of physical VMEM, capped: ~96 MiB on v5e/v6e (128 MiB), ~48 MiB on v7x."""
    try:
        cap = pltpu.get_tpu_info().vmem_capacity_bytes
    except Exception:
        cap = 64 * 1024 * 1024          # conservative fallback (v7x per-TC VMEM)
    return min(int(cap) * 3 // 4, 100 * 1024 * 1024)


def _choose_blocks(seq_len, hidden, num_classes, batch,
                   weight_bytes, per_pos_input_bytes, budget):
    """Pick (tile_b, block_l) for the (batch, sequence/K) grid axes.

    Counts the W1 chunk twice (Pallas double-buffers inputs even with a constant
    index_map) so the choice is safe on v7x's 64 MiB VMEM.
    """
    # --- K (sequence) tile: keep the double-buffered W1 chunk under ~half the budget.
    w1_row_bytes = 4 * hidden * weight_bytes            # W1 bytes per sequence position
    max_l = max(1, (budget // 2) // (2 * w1_row_bytes))
    if seq_len <= max_l:
        block_l = seq_len
    else:
        block_l = max(_LANE, (max_l // _LANE) * _LANE)

    # --- batch tile from what is left.
    resident = 2 * (4 * block_l * hidden * weight_bytes)                 # W1 chunk x2
    resident += 2 * (num_classes * hidden + hidden + num_classes) * 4    # W2^T/b1/b2
    avail = budget - resident - (2 << 20)
    per_row = (2 * block_l * per_pos_input_bytes    # input tile (ids / one-hot), 2 bufs
               + 2 * num_classes * 4                # transposed f32 out tile, 2 bufs
               + 6 * hidden * 4                     # f32 accumulator + live temporaries
               + 4 * block_l * weight_bytes)        # in-kernel mask / one-hot temps
    max_tb = max(_SUBLANE, avail // max(per_row, 1))

    if batch < 2 * _LANE:
        tile_b = batch                  # single batch step; block dims == full dims
    else:
        tile_b = min(int(max_tb), 1024)
        tile_b = max(_LANE, (tile_b // _LANE) * _LANE)
        # keep >= 2 batch grid steps so v7x's second TensorCore is not idle
        tile_b = min(tile_b, max(_LANE, _round_up((batch + 1) // 2, _LANE)))
    return int(tile_b), int(block_l)


def _finalize_store(h_acc, b1_ref, w2t_ref, b2_ref, o_ref):
    """relu(h + b1) -> transposed (num_classes, tile_b) sigmoid output."""
    h = jnp.maximum(h_acc[...] + b1_ref[...], 0.0)                 # (tile_b, H) f32
    w2t = w2t_ref[...].astype(jnp.float32)                         # (C, H)
    # y[c, b] = sum_h w2t[c, h] * h[b, h]  -> contraction on the last dim of both
    # operands ("NT" matmul), so the HBM store is lane-dense over batch instead of a
    # 1-wide (or 128-padded) masked store.
    y = lax.dot_general(w2t, h, (((1,), (1,)), ((), ())),
                        preferred_element_type=jnp.float32)        # (C, tile_b)
    o_ref[...] = jax.nn.sigmoid(y + b2_ref[...]).astype(o_ref.dtype)


def _mlp_ids_kernel(ids_ref, w1_ref, b1_ref, w2t_ref, b2_ref, o_ref, h_acc,
                    *, seq_len, block_l):
    """Base-id path: hidden += sum_base (ids == base) @ W1[base-rows-of-chunk]."""
    k = pl.program_id(1)

    @pl.when(k == 0)
    def _init():
        h_acc[...] = jnp.zeros_like(h_acc)

    ids = ids_ref[...]                                             # (tile_b, block_l) i32
    acc = h_acc[...]
    guard = (seq_len % block_l) != 0                               # static Python cond
    for base in range(4):
        w1_base = w1_ref[base]                                     # (block_l, hidden)
        if guard:
            # zero W1 rows past seq_len in the clipped last K block (clipped reads
            # are undefined and must not leak into valid rows of the accumulator)
            pos = k * block_l + lax.broadcasted_iota(jnp.int32, w1_base.shape, 0)
            w1_base = jnp.where(pos < seq_len, w1_base, 0)
        mask = (ids == base).astype(w1_base.dtype)                 # {0,1} mask
        acc = acc + jnp.dot(mask, w1_base, preferred_element_type=jnp.float32)
    h_acc[...] = acc

    @pl.when(k == pl.num_programs(1) - 1)
    def _finalize():
        _finalize_store(h_acc, b1_ref, w2t_ref, b2_ref, o_ref)


def _mlp_dense_kernel(x_ref, w1_ref, b1_ref, w2t_ref, b2_ref, o_ref, h_acc,
                      *, input_size, block_cols):
    """Dense one-hot (float) path: hidden += x_chunk @ W1_chunk."""
    k = pl.program_id(1)

    @pl.when(k == 0)
    def _init():
        h_acc[...] = jnp.zeros_like(h_acc)

    x = x_ref[...]
    w1 = w1_ref[...]
    if (input_size % block_cols) != 0:                             # static Python cond
        col = k * block_cols + lax.broadcasted_iota(jnp.int32, x.shape, 1)
        x = jnp.where(col < input_size, x, 0)
        row = k * block_cols + lax.broadcasted_iota(jnp.int32, w1.shape, 0)
        w1 = jnp.where(row < input_size, w1, 0)
    h_acc[...] += jnp.dot(x, w1, preferred_element_type=jnp.float32)

    @pl.when(k == pl.num_programs(1) - 1)
    def _finalize():
        _finalize_store(h_acc, b1_ref, w2t_ref, b2_ref, o_ref)


def _common_call(kernel, x_arr, x_block, x_index_map, w1_arr, w1_block, w1_index_map,
                 b1, w2, b2, batch, hidden, num_classes, tile_b, n_b, n_k, budget):
    b1_2d = b1.reshape(1, hidden).astype(jnp.float32)
    w2t = jnp.transpose(w2)                                        # (C, H)
    b2_2d = b2.reshape(num_classes, 1).astype(jnp.float32)

    out_t = pl.pallas_call(
        kernel,
        out_shape=jax.ShapeDtypeStruct((num_classes, batch), jnp.float32),
        grid_spec=pltpu.PrefetchScalarGridSpec(
            num_scalar_prefetch=0,
            grid=(n_b, n_k),
            in_specs=[
                pl.BlockSpec(x_block, x_index_map),                        # ids / one-hot
                pl.BlockSpec(w1_block, w1_index_map),                      # W1 chunk
                pl.BlockSpec((1, hidden), lambda i, k: (0, 0)),            # b1 (resident)
                pl.BlockSpec((num_classes, hidden), lambda i, k: (0, 0)),  # W2^T
                pl.BlockSpec((num_classes, 1), lambda i, k: (0, 0)),       # b2
            ],
            out_specs=pl.BlockSpec((num_classes, tile_b), lambda i, k: (0, i)),
            scratch_shapes=[pltpu.VMEM((tile_b, hidden), jnp.float32)],    # f32 hidden acc
        ),
        compiler_params=pltpu.CompilerParams(
            dimension_semantics=("parallel", "arbitrary"),
            vmem_limit_bytes=budget,
        ),
    )(x_arr, w1_arr, b1_2d, w2t, b2_2d)
    return jnp.transpose(out_t)                                    # (batch, num_classes)


def _forward_ids(ids, w1, b1, w2, b2, compute_dtype, tile_b, block_l):
    batch, seq_len = ids.shape
    input_size, hidden = w1.shape
    num_classes = w2.shape[1]
    assert input_size == 4 * seq_len, "W1 rows must be 4 * sequence_length"

    budget = _vmem_budget_bytes()
    wb = jnp.dtype(compute_dtype).itemsize
    auto_tb, auto_bl = _choose_blocks(seq_len, hidden, num_classes, batch,
                                      wb, 4, budget)               # 4 B/pos (int32 ids)
    tile_b = auto_tb if tile_b is None else tile_b
    block_l = auto_bl if block_l is None else block_l
    n_b = pl.cdiv(batch, tile_b)
    n_k = pl.cdiv(seq_len, block_l)

    ids = ids.astype(jnp.int32)
    # group W1 rows by base so the kernel reads contiguous (block_l, hidden) slabs:
    # w1_by_base[base, j, :] == W1[4*j + base, :]
    w1_by_base = jnp.transpose(w1.reshape(seq_len, 4, hidden), (1, 0, 2))
    w1_by_base = w1_by_base.astype(compute_dtype)
    w2c = w2.astype(compute_dtype)

    kernel = functools.partial(_mlp_ids_kernel, seq_len=seq_len, block_l=block_l)
    return _common_call(
        kernel,
        ids, (tile_b, block_l), lambda i, k: (i, k),
        w1_by_base, (4, block_l, hidden), lambda i, k: (0, k, 0),
        b1, w2c, b2, batch, hidden, num_classes, tile_b, n_b, n_k, budget)


def _forward_dense(x, w1, b1, w2, b2, compute_dtype, tile_b, block_l):
    batch, input_size = x.shape
    hidden = w1.shape[1]
    num_classes = w2.shape[1]
    seq_len = input_size // 4

    budget = _vmem_budget_bytes()
    wb = jnp.dtype(compute_dtype).itemsize
    auto_tb, auto_bl = _choose_blocks(seq_len, hidden, num_classes, batch,
                                      wb, 4 * wb, budget)
    tile_b = auto_tb if tile_b is None else tile_b
    block_l = auto_bl if block_l is None else block_l
    block_cols = 4 * block_l
    n_b = pl.cdiv(batch, tile_b)
    n_k = pl.cdiv(input_size, block_cols)

    if x.dtype != compute_dtype:
        # NOTE: prefer building the one-hot directly in compute_dtype at the caller
        # (0/1 is exact in bf16) so this extra HBM pass never happens.
        x = x.astype(compute_dtype)
    w1c = w1.astype(compute_dtype)
    w2c = w2.astype(compute_dtype)

    kernel = functools.partial(_mlp_dense_kernel,
                               input_size=input_size, block_cols=block_cols)
    return _common_call(
        kernel,
        x, (tile_b, block_cols), lambda i, k: (i, k),
        w1c, (block_cols, hidden), lambda i, k: (k, 0),
        b1, w2c, b2, batch, hidden, num_classes, tile_b, n_b, n_k, budget)


def promoter_classifier_forward(x, w1, b1, w2, b2, *,
                                compute_dtype=jnp.bfloat16,
                                tile_b=None, block_l=None):
    """Fused MLP forward: sigmoid(relu(onehot(x) @ W1 + b1) @ W2 + b2).

    Args:
      x:  either integer base ids (batch, seq_len)  -- optimized path, or a float
          one-hot tensor (batch, seq_len, 4) / (batch, seq_len*4) -- dense path.
      w1: (seq_len*4, hidden)      (transposed vs. torch's (out, in) layout)
      b1: (hidden,)
      w2: (hidden, num_classes)    (transposed vs. torch)
      b2: (num_classes,)
      compute_dtype: MXU dtype for W1/W2/one-hot (bf16 default); accumulation is f32.
    Returns:
      (batch, num_classes) float32 probabilities.
    """
    # TODO(synk): the torch module's Python-string input branch (dict lookup loop)
    # is host-side preprocessing, not a tensor op -- callers must pass ids/one-hot.
    if jnp.issubdtype(x.dtype, jnp.integer):
        assert x.ndim == 2, "integer input must be (batch, seq_len) base ids"
        return _forward_ids(x, w1, b1, w2, b2, compute_dtype, tile_b, block_l)
    if x.ndim == 3:
        x = x.reshape(x.shape[0], -1)
    return _forward_dense(x, w1, b1, w2, b2, compute_dtype, tile_b, block_l)


def init_params(key, sequence_length, hidden_neurons, num_classes):
    """nn.Linear-style init; weights kept transposed as (in, out)."""
    input_size = sequence_length * 4
    k1, k2, k3, k4 = jax.random.split(key, 4)
    lim1 = 1.0 / jnp.sqrt(jnp.float32(input_size))
    lim2 = 1.0 / jnp.sqrt(jnp.float32(hidden_neurons))
    w1 = jax.random.uniform(k1, (input_size, hidden_neurons), jnp.float32, -lim1, lim1)
    b1 = jax.random.uniform(k2, (hidden_neurons,), jnp.float32, -lim1, lim1)
    w2 = jax.random.uniform(k3, (hidden_neurons, num_classes), jnp.float32, -lim2, lim2)
    b2 = jax.random.uniform(k4, (num_classes,), jnp.float32, -lim2, lim2)
    return w1, b1, w2, b2


def _reference(x_flat, w1, b1, w2, b2):
    return jax.nn.sigmoid(jnp.maximum(x_flat @ w1 + b1, 0.0) @ w2 + b2)


if __name__ == "__main__":
    key = jax.random.PRNGKey(0)
    k_seq, k_params, k_seq2 = jax.random.split(key, 3)

    # ---- Case 1: module-default small shapes, 3-D one-hot input, f32 (tight check)
    batch, L, H, C = 2, 8, 32, 1
    w1, b1, w2, b2 = init_params(k_params, L, H, C)
    seq_ids = jax.random.randint(k_seq, (batch, L), 0, 4)
    x_onehot = jax.nn.one_hot(seq_ids, 4, dtype=jnp.float32)          # (B, L, 4)
    out_dense = promoter_classifier_forward(x_onehot, w1, b1, w2, b2,
                                            compute_dtype=jnp.float32)
    out_dense = jax.block_until_ready(out_dense)
    ref = _reference(x_onehot.reshape(batch, -1), w1, b1, w2, b2)
    assert out_dense.shape == (batch, C)
    assert jnp.allclose(out_dense, ref, atol=1e-5, rtol=1e-5)

    # ---- Case 2: same model, integer base-id input (optimized path), bf16 default
    out_ids = promoter_classifier_forward(seq_ids, w1, b1, w2, b2)
    out_ids = jax.block_until_ready(out_ids)
    assert out_ids.shape == (batch, C)
    assert jnp.allclose(out_ids, ref, atol=2e-2, rtol=2e-2)           # bf16 weights

    # ---- Case 3: larger shapes exercising the K (sequence) grid axis + multi-step
    #      batch grid with lane-dense transposed output stores.
    B3, L3 = 256, 256
    w1b, b1b, w2b, b2b = init_params(jax.random.fold_in(k_params, 3), L3, H, C)
    ids3 = jax.random.randint(k_seq2, (B3, L3), 0, 4)
    out3 = promoter_classifier_forward(ids3, w1b, b1b, w2b, b2b,
                                       compute_dtype=jnp.float32,
                                       tile_b=128, block_l=128)       # grid (2, 2)
    out3 = jax.block_until_ready(out3)
    x3 = jax.nn.one_hot(ids3, 4, dtype=jnp.float32).reshape(B3, -1)
    ref3 = _reference(x3, w1b, b1b, w2b, b2b)
    assert out3.shape == (B3, C)
    assert jnp.allclose(out3, ref3, atol=1e-4, rtol=1e-4)

    print("KERNEL_OK")
</pallas_src>

<mosaic_0001>
module attributes {stable_mosaic.version = 11 : i64} {
  func.func @_mlp_dense_kernel(%arg0: i32, %arg1: i32, %arg2: memref<2x32xf32, #tpu.memory_space<vmem>>, %arg3: memref<32x32xf32, #tpu.memory_space<vmem>>, %arg4: memref<1x32xf32, #tpu.memory_space<vmem>>, %arg5: memref<1x32xf32, #tpu.memory_space<vmem>>, %arg6: memref<1x1xf32, #tpu.memory_space<vmem>>, %arg7: memref<1x2xf32, #tpu.memory_space<vmem>>, %arg8: memref<2x32xf32, #tpu.memory_space<vmem>>) attributes {dimension_semantics = [#tpu.dimension_semantics<parallel>, #tpu.dimension_semantics<arbitrary>], iteration_bounds = array<i64: 1, 1>, scalar_prefetch = 0 : i64, scratch_operands = 1 : i64, tpu.core_type = #tpu.core_type<tc>, window_params = [{transform_indices = @transform_0, window_bounds = array<i64: 2, 32>}, {transform_indices = @transform_1, window_bounds = array<i64: 32, 32>}, {pipeline_mode = #tpu.pipeline_mode<synchronous>, transform_indices = @transform_2, window_bounds = array<i64: 1, 32>}, {pipeline_mode = #tpu.pipeline_mode<synchronous>, transform_indices = @transform_3, window_bounds = array<i64: 1, 32>}, {pipeline_mode = #tpu.pipeline_mode<synchronous>, transform_indices = @transform_4, window_bounds = array<i64: 1, 1>}, {transform_indices = @transform_5, window_bounds = array<i64: 1, 2>}]} {
    %c0_i32 = arith.constant 0 : i32
    %0 = arith.cmpi eq, %arg1, %c0_i32 : i32
    %1 = arith.extui %0 : i1 to i32
    %c0_i32_0 = arith.constant 0 : i32
    %2 = arith.cmpi ne, %1, %c0_i32_0 : i32
    scf.if %2 {
      %cst_10 = arith.constant 0.000000e+00 : f32
      %12 = vector.broadcast %cst_10 : f32 to vector<2x32xf32>
      %c0_11 = arith.constant 0 : index
      %c0_12 = arith.constant 0 : index
      %13 = vector.load %arg8[%c0_11, %c0_12] : memref<2x32xf32, #tpu.memory_space<vmem>>, vector<2x32xf32>
      tpu.vector_store %arg8[%c0_11, %c0_12], %12 {strides = array<i32>} : memref<2x32xf32, #tpu.memory_space<vmem>>, vector<2x32xf32>,
    } else {
    }
    %c0 = arith.constant 0 : index
    %c0_1 = arith.constant 0 : index
    %3 = vector.load %arg2[%c0, %c0_1] : memref<2x32xf32, #tpu.memory_space<vmem>>, vector<2x32xf32>
    %c0_2 = arith.constant 0 : index
    %c0_3 = arith.constant 0 : index
    %4 = vector.load %arg3[%c0_2, %c0_3] : memref<32x32xf32, #tpu.memory_space<vmem>>, vector<32x32xf32>
    %c0_4 = arith.constant 0 : index
    %c0_5 = arith.constant 0 : index
    %5 = vector.load %arg8[%c0_4, %c0_5] : memref<2x32xf32, #tpu.memory_space<vmem>>, vector<2x32xf32>
    %cst = arith.constant dense<0.000000e+00> : vector<2x32xf32>
    %6 = tpu.matmul %3, %4, %cst {dimension_numbers = #tpu.dot_dimension_numbers<[1], [0], [0], [1], [0, 0, 1, 1], [], []>} : vector<2x32xf32>, vector<32x32xf32>, vector<2x32xf32> -> vector<2x32xf32>
    %7 = arith.addf %5, %6 : vector<2x32xf32>
    %c0_6 = arith.constant 0 : index
    %c0_7 = arith.constant 0 : index
    %8 = vector.load %arg8[%c0_6, %c0_7] : memref<2x32xf32, #tpu.memory_space<vmem>>, vector<2x32xf32>
    tpu.vector_store %arg8[%c0_6, %c0_7], %7 {strides = array<i32>} : memref<2x32xf32, #tpu.memory_space<vmem>>, vector<2x32xf32>,
    %c0_i32_8 = arith.constant 0 : i32
    %9 = arith.cmpi eq, %arg1, %c0_i32_8 : i32
    %10 = arith.extui %9 : i1 to i32
    %c0_i32_9 = arith.constant 0 : i32
    %11 = arith.cmpi ne, %10, %c0_i32_9 : i32
    scf.if %11 {
      %c0_10 = arith.constant 0 : index
      %c0_11 = arith.constant 0 : index
      %12 = vector.load %arg8[%c0_10, %c0_11] : memref<2x32xf32, #tpu.memory_space<vmem>>, vector<2x32xf32>
      %c0_12 = arith.constant 0 : index
      %c0_13 = arith.constant 0 : index
      %13 = vector.load %arg4[%c0_12, %c0_13] : memref<1x32xf32, #tpu.memory_space<vmem>>, vector<1x32xf32>
      %14 = vector.broadcast %13 : vector<1x32xf32> to vector<2x32xf32>
      %15 = arith.addf %12, %14 : vector<2x32xf32>
      %cst_14 = arith.constant 0.000000e+00 : f32
      %16 = vector.broadcast %cst_14 : f32 to vector<2x32xf32>
      %17 = arith.maximumf %15, %16 : vector<2x32xf32>
      %c0_15 = arith.constant 0 : index
      %c0_16 = arith.constant 0 : index
      %18 = vector.load %arg5[%c0_15, %c0_16] : memref<1x32xf32, #tpu.memory_space<vmem>>, vector<1x32xf32>
      %cst_17 = arith.constant dense<0.000000e+00> : vector<1x2xf32>
      %19 = tpu.matmul %18, %17, %cst_17 {dimension_numbers = #tpu.dot_dimension_numbers<[1], [1], [0], [0], [0, 0, 1, 0], [], []>} : vector<1x32xf32>, vector<2x32xf32>, vector<1x2xf32> -> vector<1x2xf32>
      %c0_18 = arith.constant 0 : index
      %c0_19 = arith.constant 0 : index
      %20 = vector.load %arg6[%c0_18, %c0_19] : memref<1x1xf32, #tpu.memory_space<vmem>>, vector<1x1xf32>
      %21 = vector.broadcast %20 : vector<1x1xf32> to vector<1x2xf32>
      %22 = arith.addf %19, %21 : vector<1x2xf32>
      %23 = arith.negf %22 : vector<1x2xf32>
      %24 = math.exp %23 : vector<1x2xf32>
      %cst_20 = arith.constant 1.000000e+00 : f32
      %25 = vector.broadcast %cst_20 : f32 to vector<1x2xf32>
      %26 = arith.addf %25, %24 : vector<1x2xf32>
      %27 = arith.divf %25, %26 : vector<1x2xf32>
      %c0_21 = arith.constant 0 : index
      %c0_22 = arith.constant 0 : index
      %28 = vector.load %arg7[%c0_21, %c0_22] : memref<1x2xf32, #tpu.memory_space<vmem>>, vector<1x2xf32>
      tpu.vector_store %arg7[%c0_21, %c0_22], %27 {strides = array<i32>} : memref<1x2xf32, #tpu.memory_space<vmem>>, vector<1x2xf32>,
    } else {
    }
    return
  }
  func.func @transform_0(%arg0: i32, %arg1: i32) -> (i32, i32) {
    %c0_i32 = arith.constant 0 : i32
    return %arg0, %arg1 : i32, i32
  }
  func.func @transform_1(%arg0: i32, %arg1: i32) -> (i32, i32) {
    %c0_i32 = arith.constant 0 : i32
    %c0_i32_0 = arith.constant 0 : i32
    return %arg1, %c0_i32 : i32, i32
  }
  func.func @transform_2(%arg0: i32, %arg1: i32) -> (i32, i32) {
    %c0_i32 = arith.constant 0 : i32
    %c0_i32_0 = arith.constant 0 : i32
    %c0_i32_1 = arith.constant 0 : i32
    return %c0_i32, %c0_i32_0 : i32, i32
  }
  func.func @transform_3(%arg0: i32, %arg1: i32) -> (i32, i32) {
    %c0_i32 = arith.constant 0 : i32
    %c0_i32_0 = arith.constant 0 : i32
    %c0_i32_1 = arith.constant 0 : i32
    return %c0_i32, %c0_i32_0 : i32, i32
  }
  func.func @transform_4(%arg0: i32, %arg1: i32) -> (i32, i32) {
    %c0_i32 = arith.constant 0 : i32
    %c0_i32_0 = arith.constant 0 : i32
    %c0_i32_1 = arith.constant 0 : i32
    return %c0_i32, %c0_i32_0 : i32, i32
  }
  func.func @transform_5(%arg0: i32, %arg1: i32) -> (i32, i32) {
    %c0_i32 = arith.constant 0 : i32
    %c0_i32_0 = arith.constant 0 : i32
    return %c0_i32, %arg0 : i32, i32
  }
}

</mosaic_0001>

<llo_original>
// kernel: tpu_custom_call.1
$region0: #{tpu_custom_call.1}
  #allocation0 [shape = 'u32[]', space=smem, size = 0x4, offset = 0x4, fixed_abs, tag = 'smem constant byte address 0x4 - core index']
  #allocation1 [shape = 'u32[144,128]{1,0:T(1,128)}', space=vmem, size = 0x12000, scoped, tag = 'internal scratch']
  #allocation2 [shape = 'f32[2,32]{1,0:T(2,128)}', space=vmem, size = 0x400, scoped, tag = 'scratch operand']
  #allocation3 [shape = 'f32[1,1]{1,0:T(1,128)S(1)}', space=vmem, size = 0x200, scoped, tag = 'scoped memory for tpu_custom_call.1']
  %s0 = inlined_call_operand.vmem [shape: f32[2,32], index: 0, kind: input, shape index: {}]
  %s1 = inlined_call_operand.hbm [shape: f32[32,32], index: 1, kind: input, shape index: {}]
  %s2 = inlined_call_operand.vmem [shape: f32[1,32], index: 2, kind: input, shape index: {}]
  %s3 = inlined_call_operand.vmem [shape: f32[1,32], index: 3, kind: input, shape index: {}]
  %s4 = inlined_call_operand.<no memory space> [shape: f32[1,1], index: 4, kind: input, shape index: {}]
  %s5 = inlined_call_operand.hbm [shape: f32[1,2], index: 5, kind: output, shape index: {}]
  %s6 = sld [smem:[#allocation0]]
  $region42: #{tpu_custom_call.1} parent=0
    _
  %s8 = ssub.s32 1, %s6
  %s9 = scalar_select 0, %s8, %s6
  %v10 = vstv %s4
  %11 = vst [vmem:[#allocation3] sm:$0x1] %v10
  $region1: #{tpu_custom_call.1} parent=0
    #allocation4 [shape = 'u8[16384]{0}', space=vmem, size = 0x4000, scoped, tag = 'input window, operand 1, single buffered']
    #allocation5 [shape = 's32[1]{0}', space=sflag, size = 0x4, scoped, tag = 'scoped memory for tpu_custom_call.1']
    #allocation6 [shape = 's32[1]{0}', space=sflag, size = 0x4, scoped, tag = 'scoped memory for tpu_custom_call.1']
    #allocation7 [shape = 'u8[512]{0}', space=vmem, size = 0x400, scoped, tag = 'output window, operand 0, single buffered']
    %12 = vsyncpa [#allocation5], 0
    %13 = vsyncpa [#allocation6], 0
    // Predicated region
    $region2: #{tpu_custom_call.1} parent=1 // pred_check
      _
    $region3: #{tpu_custom_call.1} parent=1 // pred_check_branch
      %15 = sbr.rel (0) target = $region5
    $region4: #{tpu_custom_call.1} parent=1 // pred_region
      _
    $region5: #{tpu_custom_call.1} parent=1 // pred_fallthru
      _
    // Predicated region
    $region6: #{tpu_custom_call.1} parent=1 // pred_check
      _
    $region7: #{tpu_custom_call.1} parent=1 // pred_check_branch
      %17 = sbr.rel (0) target = $region9
    $region8: #{tpu_custom_call.1} parent=1 // pred_region
      %s19 = ssub.s32 512, 512
      %20 = vsyncadd [#allocation5], %s19
      %s21 = sshll.u32 [#allocation4], 4
      %s22 = int_to_ptr.vmem [resolvable:$true] %s21
      %27 = dma.hbm_to_vmem [thread:$0]  %s1, 512, %s22, [#allocation5], 128, 128, 8
    $region9: #{tpu_custom_call.1} parent=1 // pred_fallthru
      _
    // Predicated region
    $region10: #{tpu_custom_call.1} parent=1 // pred_check
      _
    $region11: #{tpu_custom_call.1} parent=1 // pred_check_branch
      %29 = sbr.rel (0) target = $region13
    $region12: #{tpu_custom_call.1} parent=1 // pred_region
      _
    $region13: #{tpu_custom_call.1} parent=1 // pred_fallthru
      _
    // Predicated region
    $region14: #{tpu_custom_call.1} parent=1 // pred_check
      _
    $region15: #{tpu_custom_call.1} parent=1 // pred_check_branch
      %31 = sbr.rel (0) target = $region17
    $region16: #{tpu_custom_call.1} parent=1 // pred_region
      _
    $region17: #{tpu_custom_call.1} parent=1 // pred_fallthru
      _
    // Predicated region
    $region18: #{tpu_custom_call.1} parent=1 // pred_check
      _
    $region19: #{tpu_custom_call.1} parent=1 // pred_check_branch
      %33 = sbr.rel (0) target = $region21
    $region20: #{tpu_custom_call.1} parent=1 // pred_region
      _
    $region21: #{tpu_custom_call.1} parent=1 // pred_fallthru
      _
    // Predicated region
    $region22: #{tpu_custom_call.1} parent=1 // pred_check
      _
    $region23: #{tpu_custom_call.1} parent=1 // pred_check_branch
      %35 = sbr.rel (0) target = $region25
    $region24: #{tpu_custom_call.1} parent=1 // pred_region
      %36 = dma.done [#allocation5], 512
    $region25: #{tpu_custom_call.1} parent=1 // pred_fallthru
      _
    %p37 = scmp.eq.s32.totalorder 0, 0
    // Predicated region
    $region26: #{tpu_custom_call.1} parent=1 // pred_check
      %p38 = pneg %p37
    $region27: #{tpu_custom_call.1} parent=1 // pred_check_branch
      %40 = sbr.rel (%p38) target = $region29
    $region28: #{tpu_custom_call.1} parent=1 // pred_region
      %vm41 = vcmask 254976
      %42 = vst.msk [vmem:[#allocation2] sm:$0x3] %vm41, 0.0
    $region29: #{tpu_custom_call.1} parent=1 // pred_fallthru
      _
    %v43 = vld [vmem:[%s0] sm:$0x3]
    %v44 = vld [vmem:[#allocation4] sm:$0xff]
    %v45 = vld [vmem:[#allocation4 + $0x8] sm:$0xff]
    %v46 = vld [vmem:[#allocation4 + $0x10] sm:$0xff]
    %v47 = vld [vmem:[#allocation4 + $0x18] sm:$0xff]
    %v48 = vld [vmem:[#allocation2] sm:$0x3]
    %vm49 = vcmask 261120
    %v51 = vsel %vm49, %v43, 0
    %53 = vmatprep.subr.mxu0 0.0
    %54 = vmatpush1.msra.mxu0 0.0
    %55 = vmatprep.subr.mxu0 0.0
    %56 = vmatpush1.msra.mxu0 0.0
    %57 = vmatprep.subr.mxu0 0.0
    %58 = vmatpush1.msra.mxu0 0.0
    %59 = vmatprep.subr.mxu0 0.0
    %60 = vmatpush1.msra.mxu0 0.0
    %61 = vmatprep.subr.mxu0 0.0
    %62 = vmatpush1.msra.mxu0 0.0
    %63 = vmatprep.subr.mxu0 0.0
    %64 = vmatpush1.msra.mxu0 0.0
    %65 = vmatprep.subr.mxu0 0.0
    %66 = vmatpush1.msra.mxu0 0.0
    %67 = vmatprep.subr.mxu0 0.0
    %68 = vmatpush1.msra.mxu0 0.0
    %69 = vmatprep.subr.mxu0 0.0
    %70 = vmatpush1.msra.mxu0 0.0
    %71 = vmatprep.subr.mxu0 0.0
    %72 = vmatpush1.msra.mxu0 0.0
    %73 = vmatprep.subr.mxu0 0.0
    %74 = vmatpush1.msra.mxu0 0.0
    %75 = vmatprep.subr.mxu0 0.0
    %76 = vmatpush1.msra.mxu0 0.0
    %77 = vmatprep.subr.mxu0 0.0
    %78 = vmatpush1.msra.mxu0 %v47
    %79 = vmatprep.subr.mxu0 0.0
    %80 = vmatpush1.msra.mxu0 %v46
    %81 = vmatprep.subr.mxu0 0.0
    %82 = vmatpush1.msra.mxu0 %v45
    %83 = vmatprep.subr.mxu0 0.0
    %84 = vmatpush1.msra.mxu0 %v44
    %85 = vmatprep.subr.mxu0 0.0
    %86 = vmatpush2.msra.mxu0 0.0
    %87 = vmatprep.subr.mxu0 0.0
    %88 = vmatpush2.msra.mxu0 0.0
    %89 = vmatprep.subr.mxu0 0.0
    %90 = vmatpush2.msra.mxu0 0.0
    %91 = vmatprep.subr.mxu0 0.0
    %92 = vmatpush2.msra.mxu0 0.0
    %93 = vmatprep.subr.mxu0 0.0
    %94 = vmatpush2.msra.mxu0 0.0
    %95 = vmatprep.subr.mxu0 0.0
    %96 = vmatpush2.msra.mxu0 0.0
    %97 = vmatprep.subr.mxu0 0.0
    %98 = vmatpush2.msra.mxu0 0.0
    %99 = vmatprep.subr.mxu0 0.0
    %100 = vmatpush2.msra.mxu0 0.0
    %101 = vmatprep.subr.mxu0 0.0
    %102 = vmatpush2.msra.mxu0 0.0
    %103 = vmatprep.subr.mxu0 0.0
    %104 = vmatpush2.msra.mxu0 0.0
    %105 = vmatprep.subr.mxu0 0.0
    %106 = vmatpush2.msra.mxu0 0.0
    %107 = vmatprep.subr.mxu0 0.0
    %108 = vmatpush2.msra.mxu0 0.0
    %109 = vmatprep.subr.mxu0 0.0
    %110 = vmatpush2.msra.mxu0 0.0
    %111 = vmatprep.subr.mxu0 0.0
    %112 = vmatpush2.msra.mxu0 0.0
    %113 = vmatprep.subr.mxu0 0.0
    %114 = vmatpush2.msra.mxu0 0.0
    %115 = vmatprep.subr.mxu0 0.0
    %116 = vmatpush2.msra.mxu0 0.0
    %117 = vmatprep.mubr.f32.mxu0 0.0
    %118 = vmatmul.mubr.f32.gmra.mxu0 %v51
    %v119 = vpop.f32.mrf.mxu0
    %v120 = vadd.f32 0.0, %v119
    %v121 = vpop.f32.mrf.mxu0
    %122 = vdwg.mxu0
    %v123 = vadd.f32 %v48, %v120
    %vm124 = vcmask 254976
    %125 = vst.msk [vmem:[#allocation2] sm:$0x3] %vm124, %v123
    // Predicated region
    $region30: #{tpu_custom_call.1} parent=1 // pred_check
      %p126 = pneg %p37
    $region31: #{tpu_custom_call.1} parent=1 // pred_check_branch
      %128 = sbr.rel (%p126) target = $region33
    $region32: #{tpu_custom_call.1} parent=1 // pred_region
      %v129 = vld [vmem:[#allocation2] sm:$0x3]
      %v130 = vld [vmem:[%s2] sm:$0x1]
      %v132 = vlaneseq
      %v133 = vshrl.u32 %v132, 7
      %v134 = vsub.s32 0, %v133
      %v135 = vrot.slane %v130, %v134
      %v137 = vadd.f32 %v129, %v135
      %v138 = vmax.f32 %v137, 0.0
      %v139 = vld [vmem:[%s3] sm:$0x1]
      %v140 = vld [vmem:[#allocation3] sm:$0x1]
      %142 = vset.pattern.permute.xlu0 0
      %143 = vperm.xlu0 %142, %v140
      %v144 = vpop.permute.xlu0 %143
      %v146 = vlaneseq
      %v147 = vshrl.u32 %v146, 7
      %v148 = vsub.s32 0, %v147
      %v149 = vrot.slane %v144, %v148
      %v151 = vsel %vm49, %v139, 0
      %v154 = vsel %vm49, %v138, 0
      %156 = vmatprep.subr.mxu0 0.0
      %157 = vmatpush1.xpose.msra.mxu0 0.0
      %158 = vmatprep.subr.mxu0 0.0
      %159 = vmatpush1.xpose.msra.mxu0 0.0
      %160 = vmatprep.subr.mxu0 0.0
      %161 = vmatpush1.xpose.msra.mxu0 0.0
      %162 = vmatprep.subr.mxu0 0.0
      %163 = vmatpush1.xpose.msra.mxu0 0.0
      %164 = vmatprep.subr.mxu0 0.0
      %165 = vmatpush1.xpose.msra.mxu0 0.0
      %166 = vmatprep.subr.mxu0 0.0
      %167 = vmatpush1.xpose.msra.mxu0 0.0
      %168 = vmatprep.subr.mxu0 0.0
      %169 = vmatpush1.xpose.msra.mxu0 0.0
      %170 = vmatprep.subr.mxu0 0.0
      %171 = vmatpush1.xpose.msra.mxu0 0.0
      %172 = vmatprep.subr.mxu0 0.0
      %173 = vmatpush1.xpose.msra.mxu0 0.0
      %174 = vmatprep.subr.mxu0 0.0
      %175 = vmatpush1.xpose.msra.mxu0 0.0
      %176 = vmatprep.subr.mxu0 0.0
      %177 = vmatpush1.xpose.msra.mxu0 0.0
      %178 = vmatprep.subr.mxu0 0.0
      %179 = vmatpush1.xpose.msra.mxu0 0.0
      %180 = vmatprep.subr.mxu0 0.0
      %181 = vmatpush1.xpose.msra.mxu0 0.0
      %182 = vmatprep.subr.mxu0 0.0
      %183 = vmatpush1.xpose.msra.mxu0 0.0
      %184 = vmatprep.subr.mxu0 0.0
      %185 = vmatpush1.xpose.msra.mxu0 0.0
      %186 = vmatprep.subr.mxu0 0.0
      %187 = vmatpush1.xpose.msra.mxu0 %v154
      %188 = vmatprep.subr.mxu0 0.0
      %189 = vmatpush2.xpose.msra.mxu0 0.0
      %190 = vmatprep.subr.mxu0 0.0
      %191 = vmatpush2.xpose.msra.mxu0 0.0
      %192 = vmatprep.subr.mxu0 0.0
      %193 = vmatpush2.xpose.msra.mxu0 0.0
      %194 = vmatprep.subr.mxu0 0.0
      %195 = vmatpush2.xpose.msra.mxu0 0.0
      %196 = vmatprep.subr.mxu0 0.0
      %197 = vmatpush2.xpose.msra.mxu0 0.0
      %198 = vmatprep.subr.mxu0 0.0
      %199 = vmatpush2.xpose.msra.mxu0 0.0
      %200 = vmatprep.subr.mxu0 0.0
      %201 = vmatpush2.xpose.msra.mxu0 0.0
      %202 = vmatprep.subr.mxu0 0.0
      %203 = vmatpush2.xpose.msra.mxu0 0.0
      %204 = vmatprep.subr.mxu0 0.0
      %205 = vmatpush2.xpose.msra.mxu0 0.0
      %206 = vmatprep.subr.mxu0 0.0
      %207 = vmatpush2.xpose.msra.mxu0 0.0
      %208 = vmatprep.subr.mxu0 0.0
      %209 = vmatpush2.xpose.msra.mxu0 0.0
      %210 = vmatprep.subr.mxu0 0.0
      %211 = vmatpush2.xpose.msra.mxu0 0.0
      %212 = vmatprep.subr.mxu0 0.0
      %213 = vmatpush2.xpose.msra.mxu0 0.0
      %214 = vmatprep.subr.mxu0 0.0
      %215 = vmatpush2.xpose.msra.mxu0 0.0
      %216 = vmatprep.subr.mxu0 0.0
      %217 = vmatpush2.xpose.msra.mxu0 0.0
      %218 = vmatprep.subr.mxu0 0.0
      %219 = vmatpush2.xpose.msra.mxu0 0.0
      %220 = vmatprep.mubr.f32.mxu0 0.0
      %221 = vmatmul.mubr.f32.gmra.mxu0 %v151
      %v222 = vpop.f32.mrf.mxu0
      %v223 = vadd.f32 %v149, %v222
      %v224 = vpop.f32.mrf.mxu0
      %225 = vdwg.mxu0
      %v226 = vxor.u32 %v223, 2147483648
      %v227 = vmul.f32 %v226, 1.442695
      %v228 = vpow.pop %v227
      %v229 = vadd.f32 %v228, 1.0
      %v230 = vrcp.pop %v229
      %v231 = vmul.f32 1.0, %v230
      %vm232 = vcmask 8192
      %233 = vst.msk [vmem:[#allocation7] sm:$0x1] %vm232, %v231
    $region33: #{tpu_custom_call.1} parent=1 // pred_fallthru
      _
    // Predicated region
    $region34: #{tpu_custom_call.1} parent=1 // pred_check
      _
    $region35: #{tpu_custom_call.1} parent=1 // pred_check_branch
      %235 = sbr.rel (0) target = $region37
    $region36: #{tpu_custom_call.1} parent=1 // pred_region
      %s237 = ssub.s32 16, 16
      %238 = vsyncadd [#allocation6], %s237
      %s240 = sshll.u32 [#allocation7], 4
      %s241 = int_to_ptr.vmem [resolvable:$true] %s240
      %243 = dma.vmem_to_hbm [thread:$0]  %s241, 16, %s5, [#allocation6]
    $region37: #{tpu_custom_call.1} parent=1 // pred_fallthru
      _
    // Predicated region
    $region38: #{tpu_custom_call.1} parent=1 // pred_check
      _
    $region39: #{tpu_custom_call.1} parent=1 // pred_check_branch
      %245 = sbr.rel (0) target = $region41
    $region40: #{tpu_custom_call.1} parent=1 // pred_region
      %246 = dma.done [#allocation6], 16
    $region41: #{tpu_custom_call.1} parent=1 // pred_fallthru
      _
    %247 = vsyncpa [#allocation5], 1
    %248 = vsyncpa [#allocation6], 1

</llo_original>
